<compile_context>
chip_gen: v5e
topology: v5e:2x2
jax: 0.10.0
libtpu: 0.0.40
codegen_flags: <defaults>
</compile_context>

<pallas_src>
import jax
import jax.numpy as jnp
from jax.experimental import pallas as pl
from jax.experimental.pallas import tpu as pltpu

# ---- module hyper-parameters (match __init__ defaults) ----------------------
TASK_SIZE = 4
STATE_SIZE = 8
ACTION_SIZE = 5
HIDDEN_SIZE = 32
SIGNAL_SIZE = 6
DROP_P = 0.1          # nn.Dropout(p=0.1), module in train() mode
TAU = 1.0             # F.gumbel_softmax default
HARD = False          # self.hard default in train mode

IN_WIDTH = TASK_SIZE + STATE_SIZE + SIGNAL_SIZE          # 18 = [task|state|signal]
ENC_WIDTH = TASK_SIZE + 2 * HIDDEN_SIZE                  # 68 = [task|sv|gv]
HEAD_WIDTH = ACTION_SIZE + SIGNAL_SIZE                   # 11 = [action|signal]


# =============================================================================
# Kernel: everything is (features, batch_tile); batch lives on the lane axis.
# =============================================================================
def gumbel_shared_kernel(x_ref, u_drop_ref, u_gum_ref,
                         w_big_ref, w_comb_ref, w_heads_ref,
                         b_enc_ref, b_c_ref, b_heads_ref, out_ref):
    keep = 1.0 - DROP_P
    inv_keep = 1.0 / keep

    x = x_ref[...]                                   # (18, TB) bf16

    # --- fused encoders + task passthrough: (68,18) @ (18,TB) ---------------
    # rows [0,4): task (identity), [4,36): state_encoder, [36,68): signal_encoder
    a = jnp.dot(w_big_ref[...], x, preferred_element_type=jnp.float32)
    a = a + b_enc_ref[...]                           # (68,1) broadcast over lanes

    # dropout applied to the linear output, THEN tanh (matches the module:
    # tanh(dropout(encoder(x)))); task rows pass through untouched.
    u_drop = u_drop_ref[...]                         # (68, TB) uniforms
    dropped = jnp.where(u_drop < keep, a * inv_keep, 0.0)
    enc = jnp.tanh(dropped)
    row_e = jax.lax.broadcasted_iota(jnp.int32, a.shape, 0)
    act = jnp.where(row_e < TASK_SIZE, a, enc)       # (68, TB)

    # --- combined_fc: (32,68) @ (68,TB) --------------------------------------
    cv = jnp.tanh(
        jnp.dot(w_comb_ref[...], act.astype(jnp.bfloat16),
                preferred_element_type=jnp.float32) + b_c_ref[...])     # (32, TB)

    # --- fused heads: (11,32) @ (32,TB) = [action rows | signal rows] --------
    heads = jnp.dot(w_heads_ref[...], cv.astype(jnp.bfloat16),
                    preferred_element_type=jnp.float32) + b_heads_ref[...]  # (11,TB)

    # --- gumbel_softmax(signal rows, tau=1, hard=False) ----------------------
    row_h = jax.lax.broadcasted_iota(jnp.int32, heads.shape, 0)
    is_sig = row_h >= ACTION_SIZE
    eps = 1e-10
    g = -jnp.log(-jnp.log(u_gum_ref[...] + eps) + eps)        # (11, TB) gumbels
    logits = jnp.where(is_sig, (heads + g) / TAU, -1e30)
    logits = logits - jnp.max(logits, axis=0, keepdims=True)
    e = jnp.where(is_sig, jnp.exp(logits), 0.0)
    probs = e / jnp.sum(e, axis=0, keepdims=True)              # exact simplex

    # rows [0,5): action_score, rows [5,11): signal_prob — lane-dense store
    out_ref[...] = jnp.where(is_sig, probs, heads)


# =============================================================================
# Wrapper
# =============================================================================
def gumbel_shared_forward(key, task, state, signal, packed, *,
                          tile_b=1024, return_noise=False):
    """Returns (action_score (B,5), signal_prob (B,6))."""
    B = task.shape[0]

    # one activation slab, transposed to (features, batch), bf16 for the MXU
    x = jnp.concatenate([task, state, signal], axis=1)          # (B, 18)
    xT = x.T.astype(jnp.bfloat16)                               # (18, B)

    # batch tile: multiple of 128 lanes; pad batch to a multiple of the tile.
    # (TB=1024 keeps double-buffered tiles well under v5e's 16 MiB scoped VMEM
    #  and v7x's 64 MiB physical VMEM; v6e has ample headroom.)
    bp128 = pl.cdiv(B, 128) * 128
    TB = max(128, (min(tile_b, bp128) // 128) * 128)
    Bp = pl.cdiv(bp128, TB) * TB
    if Bp != B:
        xT = jnp.pad(xT, ((0, 0), (0, Bp - B)))

    # wrapper-side randomness (portable; per-column noise -> independent per row)
    k_d, k_g = jax.random.split(key)
    u_drop = jax.random.uniform(k_d, (ENC_WIDTH, Bp), jnp.float32)
    u_gum = jax.random.uniform(k_g, (HEAD_WIDTH, Bp), jnp.float32)

    grid = (Bp // TB,)

    def batch_spec(rows):
        return pl.BlockSpec((rows, TB), lambda i: (0, i))

    def const_spec(shape):
        return pl.BlockSpec(shape, lambda i: (0, 0))   # VMEM-resident, no re-DMA

    # TODO(synk): sweep pipeline_mode=pl.Buffered(3) on the batch-tiled specs
    #             once measured; per-tile DMA here is latency- not BW-bound.
    out = pl.pallas_call(
        gumbel_shared_kernel,
        out_shape=jax.ShapeDtypeStruct((HEAD_WIDTH, Bp), jnp.float32),
        grid=grid,
        in_specs=[
            batch_spec(IN_WIDTH),                    # xT         (18, TB)
            batch_spec(ENC_WIDTH),                   # u_drop     (68, TB)
            batch_spec(HEAD_WIDTH),                  # u_gum      (11, TB)
            const_spec((ENC_WIDTH, IN_WIDTH)),       # w_big^T    (68, 18)
            const_spec((HIDDEN_SIZE, ENC_WIDTH)),    # w_comb^T   (32, 68)
            const_spec((HEAD_WIDTH, HIDDEN_SIZE)),   # w_heads^T  (11, 32)
            const_spec((ENC_WIDTH, 1)),              # b_enc
            const_spec((HIDDEN_SIZE, 1)),            # b_c
            const_spec((HEAD_WIDTH, 1)),             # b_heads
        ],
        out_specs=batch_spec(HEAD_WIDTH),
        compiler_params=pltpu.CompilerParams(
            dimension_semantics=("parallel",),       # megacore sharding on v7x
            vmem_limit_bytes=32 << 20),
    )(xT, u_drop, u_gum,
      packed["w_big_t"], packed["w_comb_t"], packed["w_heads_t"],
      packed["b_enc"], packed["b_c"], packed["b_heads"])

    action_score = out[:ACTION_SIZE, :B].T            # (B, 5)
    signal_prob = out[ACTION_SIZE:, :B].T              # (B, 6)
    if return_noise:
        return action_score, signal_prob, (u_drop, u_gum)
    return action_score, signal_prob


# =============================================================================
# Parameters (PyTorch-style per-layer init) and kernel-ready packing
# =============================================================================
def init_params(key):
    ks = jax.random.split(key, 5)

    def lin(k, fan_in, fan_out):
        bound = 1.0 / jnp.sqrt(jnp.float32(fan_in))
        kw, kb = jax.random.split(k)
        w = jax.random.uniform(kw, (fan_in, fan_out), jnp.float32, -bound, bound)
        b = jax.random.uniform(kb, (1, fan_out), jnp.float32, -bound, bound)
        return w, b

    w_se, b_se = lin(ks[0], STATE_SIZE, HIDDEN_SIZE)       # state_encoder
    w_sg, b_sg = lin(ks[1], SIGNAL_SIZE, HIDDEN_SIZE)      # signal_encoder
    w_c, b_c = lin(ks[2], ENC_WIDTH, HIDDEN_SIZE)          # combined_fc (task|sv|gv)
    w_sm, b_sm = lin(ks[3], HIDDEN_SIZE, SIGNAL_SIZE)      # signal_module
    w_am, b_am = lin(ks[4], HIDDEN_SIZE, ACTION_SIZE)      # action_module
    return dict(w_se=w_se, b_se=b_se, w_sg=w_sg, b_sg=b_sg,
                w_c=w_c, b_c=b_c, w_sm=w_sm, b_sm=b_sm, w_am=w_am, b_am=b_am)


def pack_params(p):
    """Pack into 3 transposed bf16 weight slabs + 3 f32 bias columns."""
    # block-diagonal encoder slab (in=18, out=68) with identity task passthrough
    w_big = jnp.zeros((IN_WIDTH, ENC_WIDTH), jnp.float32)
    w_big = w_big.at[:TASK_SIZE, :TASK_SIZE].set(jnp.eye(TASK_SIZE, dtype=jnp.float32))
    w_big = w_big.at[TASK_SIZE:TASK_SIZE + STATE_SIZE,
                     TASK_SIZE:TASK_SIZE + HIDDEN_SIZE].set(p["w_se"])
    w_big = w_big.at[TASK_SIZE + STATE_SIZE:,
                     TASK_SIZE + HIDDEN_SIZE:].set(p["w_sg"])
    b_enc = jnp.concatenate(
        [jnp.zeros((TASK_SIZE,), jnp.float32), p["b_se"][0], p["b_sg"][0]])

    w_heads = jnp.concatenate([p["w_am"], p["w_sm"]], axis=1)     # (32, 11)
    b_heads = jnp.concatenate([p["b_am"][0], p["b_sm"][0]])       # (11,)

    return dict(
        w_big_t=w_big.T.astype(jnp.bfloat16),                     # (68, 18)
        w_comb_t=p["w_c"].T.astype(jnp.bfloat16),                 # (32, 68)
        w_heads_t=w_heads.T.astype(jnp.bfloat16),                 # (11, 32)
        b_enc=b_enc.reshape(ENC_WIDTH, 1),
        b_c=p["b_c"][0].reshape(HIDDEN_SIZE, 1),
        b_heads=b_heads.reshape(HEAD_WIDTH, 1),
    )


# =============================================================================
# Pure-JAX reference (same noise) for a numerical check
# =============================================================================
def _reference_forward(task, state, signal, p, u_drop_bt, u_gum_bt):
    keep = 1.0 - DROP_P

    def dropout(x, u):
        return jnp.where(u < keep, x / keep, 0.0)

    sv = jnp.tanh(dropout(state @ p["w_se"] + p["b_se"],
                          u_drop_bt[:, TASK_SIZE:TASK_SIZE + HIDDEN_SIZE]))
    gv = jnp.tanh(dropout(signal @ p["w_sg"] + p["b_sg"],
                          u_drop_bt[:, TASK_SIZE + HIDDEN_SIZE:]))
    cv = jnp.tanh(jnp.concatenate([task, sv, gv], axis=1) @ p["w_c"] + p["b_c"])
    action = cv @ p["w_am"] + p["b_am"]
    sig_score = cv @ p["w_sm"] + p["b_sm"]
    eps = 1e-10
    g = -jnp.log(-jnp.log(u_gum_bt[:, ACTION_SIZE:] + eps) + eps)
    probs = jax.nn.softmax((sig_score + g) / TAU, axis=-1)
    return action, probs


if __name__ == "__main__":
    batch = 2
    key = jax.random.PRNGKey(0)
    k_p, k_t, k_s, k_g, k_n = jax.random.split(key, 5)

    params = init_params(k_p)
    packed = pack_params(params)

    task = jax.random.normal(k_t, (batch, TASK_SIZE), jnp.float32)
    state = jax.random.normal(k_s, (batch, STATE_SIZE), jnp.float32)
    signal = jax.random.normal(k_g, (batch, SIGNAL_SIZE), jnp.float32)

    action_score, signal_prob, (u_drop, u_gum) = gumbel_shared_forward(
        k_n, task, state, signal, packed, return_noise=True)
    jax.block_until_ready((action_score, signal_prob))

    # shape / sanity checks
    assert action_score.shape == (batch, ACTION_SIZE)
    assert signal_prob.shape == (batch, SIGNAL_SIZE)
    assert bool(jnp.all(jnp.isfinite(action_score)))
    assert bool(jnp.all(signal_prob >= 0.0))
    assert jnp.allclose(jnp.sum(signal_prob, axis=-1), 1.0, atol=1e-4)

    # numerical check against a pure-JAX f32 reference using the same noise
    # (tolerance accounts for bf16 MXU operands in the kernel)
    ref_a, ref_p = _reference_forward(task, state, signal, params,
                                      u_drop[:, :batch].T, u_gum[:, :batch].T)
    assert jnp.allclose(action_score, ref_a, atol=0.08, rtol=0.05)
    assert jnp.allclose(signal_prob, ref_p, atol=0.08, rtol=0.05)

    print("KERNEL_OK")
</pallas_src>

<mosaic_0001>
module attributes {stable_mosaic.version = 11 : i64} {
  func.func @gumbel_shared_kernel(%arg0: i32, %arg1: memref<18x128xbf16, #tpu.memory_space<vmem>>, %arg2: memref<68x128xf32, #tpu.memory_space<vmem>>, %arg3: memref<11x128xf32, #tpu.memory_space<vmem>>, %arg4: memref<68x18xbf16, #tpu.memory_space<vmem>>, %arg5: memref<32x68xbf16, #tpu.memory_space<vmem>>, %arg6: memref<11x32xbf16, #tpu.memory_space<vmem>>, %arg7: memref<68x1xf32, #tpu.memory_space<vmem>>, %arg8: memref<32x1xf32, #tpu.memory_space<vmem>>, %arg9: memref<11x1xf32, #tpu.memory_space<vmem>>, %arg10: memref<11x128xf32, #tpu.memory_space<vmem>>) attributes {dimension_semantics = [#tpu.dimension_semantics<parallel>], iteration_bounds = array<i64: 1>, scalar_prefetch = 0 : i64, scratch_operands = 0 : i64, tpu.core_type = #tpu.core_type<tc>, window_params = [{transform_indices = @transform_0, window_bounds = array<i64: 18, 128>}, {transform_indices = @transform_1, window_bounds = array<i64: 68, 128>}, {transform_indices = @transform_2, window_bounds = array<i64: 11, 128>}, {pipeline_mode = #tpu.pipeline_mode<synchronous>, transform_indices = @transform_3, window_bounds = array<i64: 68, 18>}, {pipeline_mode = #tpu.pipeline_mode<synchronous>, transform_indices = @transform_4, window_bounds = array<i64: 32, 68>}, {pipeline_mode = #tpu.pipeline_mode<synchronous>, transform_indices = @transform_5, window_bounds = array<i64: 11, 32>}, {pipeline_mode = #tpu.pipeline_mode<synchronous>, transform_indices = @transform_6, window_bounds = array<i64: 68, 1>}, {pipeline_mode = #tpu.pipeline_mode<synchronous>, transform_indices = @transform_7, window_bounds = array<i64: 32, 1>}, {pipeline_mode = #tpu.pipeline_mode<synchronous>, transform_indices = @transform_8, window_bounds = array<i64: 11, 1>}, {transform_indices = @transform_9, window_bounds = array<i64: 11, 128>}]} {
    %c0 = arith.constant 0 : index
    %c0_0 = arith.constant 0 : index
    %0 = vector.load %arg1[%c0, %c0_0] : memref<18x128xbf16, #tpu.memory_space<vmem>>, vector<18x128xbf16>
    %c0_1 = arith.constant 0 : index
    %c0_2 = arith.constant 0 : index
    %1 = vector.load %arg4[%c0_1, %c0_2] : memref<68x18xbf16, #tpu.memory_space<vmem>>, vector<68x18xbf16>
    %cst = arith.constant dense<0.000000e+00> : vector<68x128xf32>
    %2 = tpu.matmul %1, %0, %cst {dimension_numbers = #tpu.dot_dimension_numbers<[1], [0], [0], [1], [0, 0, 1, 1], [], []>} : vector<68x18xbf16>, vector<18x128xbf16>, vector<68x128xf32> -> vector<68x128xf32>
    %c0_3 = arith.constant 0 : index
    %c0_4 = arith.constant 0 : index
    %3 = vector.load %arg7[%c0_3, %c0_4] : memref<68x1xf32, #tpu.memory_space<vmem>>, vector<68x1xf32>
    %4 = vector.broadcast %3 : vector<68x1xf32> to vector<68x128xf32>
    %5 = arith.addf %2, %4 : vector<68x128xf32>
    %c0_5 = arith.constant 0 : index
    %c0_6 = arith.constant 0 : index
    %6 = vector.load %arg2[%c0_5, %c0_6] : memref<68x128xf32, #tpu.memory_space<vmem>>, vector<68x128xf32>
    %cst_7 = arith.constant 0.899999976 : f32
    %7 = vector.broadcast %cst_7 : f32 to vector<68x128xf32>
    %8 = arith.cmpf olt, %6, %7 : vector<68x128xf32>
    %cst_8 = arith.constant 1.11111116 : f32
    %9 = vector.broadcast %cst_8 : f32 to vector<68x128xf32>
    %10 = arith.mulf %5, %9 : vector<68x128xf32>
    %cst_9 = arith.constant 0.000000e+00 : f32
    %11 = vector.broadcast %cst_9 : f32 to vector<68x128xf32>
    %12 = arith.select %8, %10, %11 : vector<68x128xi1>, vector<68x128xf32>
    %13 = math.tanh %12 : vector<68x128xf32>
    %14 = tpu.iota {dimensions = array<i32: 0>} : vector<68x128xi32>
    %c4_i32 = arith.constant 4 : i32
    %15 = vector.broadcast %c4_i32 : i32 to vector<68x128xi32>
    %16 = arith.cmpi slt, %14, %15 : vector<68x128xi32>
    %17 = arith.select %16, %5, %13 : vector<68x128xi1>, vector<68x128xf32>
    %c0_10 = arith.constant 0 : index
    %c0_11 = arith.constant 0 : index
    %18 = vector.load %arg5[%c0_10, %c0_11] : memref<32x68xbf16, #tpu.memory_space<vmem>>, vector<32x68xbf16>
    %19 = arith.truncf %17 : vector<68x128xf32> to vector<68x128xbf16>
    %cst_12 = arith.constant dense<0.000000e+00> : vector<32x128xf32>
    %20 = tpu.matmul %18, %19, %cst_12 {dimension_numbers = #tpu.dot_dimension_numbers<[1], [0], [0], [1], [0, 0, 1, 1], [], []>} : vector<32x68xbf16>, vector<68x128xbf16>, vector<32x128xf32> -> vector<32x128xf32>
    %c0_13 = arith.constant 0 : index
    %c0_14 = arith.constant 0 : index
    %21 = vector.load %arg8[%c0_13, %c0_14] : memref<32x1xf32, #tpu.memory_space<vmem>>, vector<32x1xf32>
    %22 = vector.broadcast %21 : vector<32x1xf32> to vector<32x128xf32>
    %23 = arith.addf %20, %22 : vector<32x128xf32>
    %24 = math.tanh %23 : vector<32x128xf32>
    %c0_15 = arith.constant 0 : index
    %c0_16 = arith.constant 0 : index
    %25 = vector.load %arg6[%c0_15, %c0_16] : memref<11x32xbf16, #tpu.memory_space<vmem>>, vector<11x32xbf16>
    %26 = arith.truncf %24 : vector<32x128xf32> to vector<32x128xbf16>
    %cst_17 = arith.constant dense<0.000000e+00> : vector<11x128xf32>
    %27 = tpu.matmul %25, %26, %cst_17 {dimension_numbers = #tpu.dot_dimension_numbers<[1], [0], [0], [1], [0, 0, 1, 1], [], []>} : vector<11x32xbf16>, vector<32x128xbf16>, vector<11x128xf32> -> vector<11x128xf32>
    %c0_18 = arith.constant 0 : index
    %c0_19 = arith.constant 0 : index
    %28 = vector.load %arg9[%c0_18, %c0_19] : memref<11x1xf32, #tpu.memory_space<vmem>>, vector<11x1xf32>
    %29 = vector.broadcast %28 : vector<11x1xf32> to vector<11x128xf32>
    %30 = arith.addf %27, %29 : vector<11x128xf32>
    %31 = tpu.iota {dimensions = array<i32: 0>} : vector<11x128xi32>
    %c5_i32 = arith.constant 5 : i32
    %32 = vector.broadcast %c5_i32 : i32 to vector<11x128xi32>
    %33 = arith.cmpi sge, %31, %32 : vector<11x128xi32>
    %c0_20 = arith.constant 0 : index
    %c0_21 = arith.constant 0 : index
    %34 = vector.load %arg3[%c0_20, %c0_21] : memref<11x128xf32, #tpu.memory_space<vmem>>, vector<11x128xf32>
    %cst_22 = arith.constant 1.000000e-10 : f32
    %35 = vector.broadcast %cst_22 : f32 to vector<11x128xf32>
    %36 = arith.addf %34, %35 : vector<11x128xf32>
    %37 = math.log %36 : vector<11x128xf32>
    %cst_23 = arith.constant 0.000000e+00 : f32
    %38 = vector.broadcast %cst_23 : f32 to vector<11x128xf32>
    %39 = arith.subf %38, %37 : vector<11x128xf32>
    %cst_24 = arith.constant 1.000000e-10 : f32
    %40 = vector.broadcast %cst_24 : f32 to vector<11x128xf32>
    %41 = arith.addf %39, %40 : vector<11x128xf32>
    %42 = math.log %41 : vector<11x128xf32>
    %cst_25 = arith.constant 0.000000e+00 : f32
    %43 = vector.broadcast %cst_25 : f32 to vector<11x128xf32>
    %44 = arith.subf %43, %42 : vector<11x128xf32>
    %45 = arith.addf %30, %44 : vector<11x128xf32>
    %cst_26 = arith.constant 1.000000e+00 : f32
    %46 = vector.broadcast %cst_26 : f32 to vector<11x128xf32>
    %47 = arith.divf %45, %46 : vector<11x128xf32>
    %cst_27 = arith.constant -1.000000e+30 : f32
    %48 = vector.broadcast %cst_27 : f32 to vector<11x128xf32>
    %49 = arith.select %33, %47, %48 : vector<11x128xi1>, vector<11x128xf32>
    %cst_28 = arith.constant dense<0xFF800000> : vector<128xf32>
    %50 = vector.multi_reduction <maximumf>, %49, %cst_28 [0] : vector<11x128xf32> to vector<128xf32>
    %51 = vector.shape_cast %50 : vector<128xf32> to vector<1x128xf32>
    %52 = vector.broadcast %51 : vector<1x128xf32> to vector<11x128xf32>
    %53 = arith.subf %49, %52 : vector<11x128xf32>
    %54 = math.exp %53 : vector<11x128xf32>
    %cst_29 = arith.constant 0.000000e+00 : f32
    %55 = vector.broadcast %cst_29 : f32 to vector<11x128xf32>
    %56 = arith.select %33, %54, %55 : vector<11x128xi1>, vector<11x128xf32>
    %cst_30 = arith.constant dense<0.000000e+00> : vector<128xf32>
    %57 = vector.multi_reduction <add>, %56, %cst_30 [0] : vector<11x128xf32> to vector<128xf32>
    %58 = vector.shape_cast %57 : vector<128xf32> to vector<1x128xf32>
    %59 = vector.broadcast %58 : vector<1x128xf32> to vector<11x128xf32>
    %60 = arith.divf %56, %59 : vector<11x128xf32>
    %61 = arith.select %33, %60, %30 : vector<11x128xi1>, vector<11x128xf32>
    %c0_31 = arith.constant 0 : index
    %c0_32 = arith.constant 0 : index
    %62 = vector.load %arg10[%c0_31, %c0_32] : memref<11x128xf32, #tpu.memory_space<vmem>>, vector<11x128xf32>
    tpu.vector_store %arg10[%c0_31, %c0_32], %61 {strides = array<i32>} : memref<11x128xf32, #tpu.memory_space<vmem>>, vector<11x128xf32>,
    return
  }
  func.func @transform_0(%arg0: i32) -> (i32, i32) {
    %c0_i32 = arith.constant 0 : i32
    %c0_i32_0 = arith.constant 0 : i32
    return %c0_i32, %arg0 : i32, i32
  }
  func.func @transform_1(%arg0: i32) -> (i32, i32) {
    %c0_i32 = arith.constant 0 : i32
    %c0_i32_0 = arith.constant 0 : i32
    return %c0_i32, %arg0 : i32, i32
  }
  func.func @transform_2(%arg0: i32) -> (i32, i32) {
    %c0_i32 = arith.constant 0 : i32
    %c0_i32_0 = arith.constant 0 : i32
    return %c0_i32, %arg0 : i32, i32
  }
  func.func @transform_3(%arg0: i32) -> (i32, i32) {
    %c0_i32 = arith.constant 0 : i32
    %c0_i32_0 = arith.constant 0 : i32
    %c0_i32_1 = arith.constant 0 : i32
    return %c0_i32, %c0_i32_0 : i32, i32
  }
  func.func @transform_4(%arg0: i32) -> (i32, i32) {
    %c0_i32 = arith.constant 0 : i32
    %c0_i32_0 = arith.constant 0 : i32
    %c0_i32_1 = arith.constant 0 : i32
    return %c0_i32, %c0_i32_0 : i32, i32
  }
  func.func @transform_5(%arg0: i32) -> (i32, i32) {
    %c0_i32 = arith.constant 0 : i32
    %c0_i32_0 = arith.constant 0 : i32
    %c0_i32_1 = arith.constant 0 : i32
    return %c0_i32, %c0_i32_0 : i32, i32
  }
  func.func @transform_6(%arg0: i32) -> (i32, i32) {
    %c0_i32 = arith.constant 0 : i32
    %c0_i32_0 = arith.constant 0 : i32
    %c0_i32_1 = arith.constant 0 : i32
    return %c0_i32, %c0_i32_0 : i32, i32
  }
  func.func @transform_7(%arg0: i32) -> (i32, i32) {
    %c0_i32 = arith.constant 0 : i32
    %c0_i32_0 = arith.constant 0 : i32
    %c0_i32_1 = arith.constant 0 : i32
    return %c0_i32, %c0_i32_0 : i32, i32
  }
  func.func @transform_8(%arg0: i32) -> (i32, i32) {
    %c0_i32 = arith.constant 0 : i32
    %c0_i32_0 = arith.constant 0 : i32
    %c0_i32_1 = arith.constant 0 : i32
    return %c0_i32, %c0_i32_0 : i32, i32
  }
  func.func @transform_9(%arg0: i32) -> (i32, i32) {
    %c0_i32 = arith.constant 0 : i32
    %c0_i32_0 = arith.constant 0 : i32
    return %c0_i32, %arg0 : i32, i32
  }
}

</mosaic_0001>

<llo_original>
// kernel: tpu_custom_call.1
$region0: #{tpu_custom_call.1}
  #allocation0 [shape = 'u32[]', space=smem, size = 0x4, offset = 0x4, fixed_abs, tag = 'smem constant byte address 0x4 - core index']
  #allocation1 [shape = 'u32[72,128]{1,0:T(1,128)}', space=vmem, size = 0x9000, scoped, tag = 'internal scratch']
  %s0 = inlined_call_operand.vmem [shape: bf16[18,128], index: 0, kind: input, shape index: {}]
  %s1 = inlined_call_operand.vmem [shape: f32[68,128], index: 1, kind: input, shape index: {}]
  %s2 = inlined_call_operand.vmem [shape: f32[11,128], index: 2, kind: input, shape index: {}]
  %s3 = inlined_call_operand.vmem [shape: bf16[68,18], index: 3, kind: input, shape index: {}]
  %s4 = inlined_call_operand.vmem [shape: bf16[32,68], index: 4, kind: input, shape index: {}]
  %s5 = inlined_call_operand.vmem [shape: bf16[11,32], index: 5, kind: input, shape index: {}]
  %s6 = inlined_call_operand.vmem [shape: f32[68,1], index: 6, kind: input, shape index: {}]
  %s7 = inlined_call_operand.vmem [shape: f32[32,1], index: 7, kind: input, shape index: {}]
  %s8 = inlined_call_operand.vmem [shape: f32[11,1], index: 8, kind: input, shape index: {}]
  %s9 = inlined_call_operand.hbm [shape: f32[11,128], index: 9, kind: output, shape index: {}]
  %s10 = sld [smem:[#allocation0]]
  $region46: #{tpu_custom_call.1} parent=0
    _
  %s12 = ssub.s32 1, %s10
  %s13 = scalar_select 0, %s12, %s10
  $region1: #{tpu_custom_call.1} parent=0
    #allocation2 [shape = 'u8[8192]{0}', space=vmem, size = 0x2000, scoped, tag = 'output window, operand 0, single buffered']
    #allocation3 [shape = 's32[1]{0}', space=sflag, size = 0x4, scoped, tag = 'scoped memory for tpu_custom_call.1']
    %14 = vsyncpa [#allocation3], 0
    // Predicated region
    $region2: #{tpu_custom_call.1} parent=1 // pred_check
      _
    $region3: #{tpu_custom_call.1} parent=1 // pred_check_branch
      %16 = sbr.rel (0) target = $region5
    $region4: #{tpu_custom_call.1} parent=1 // pred_region
      _
    $region5: #{tpu_custom_call.1} parent=1 // pred_fallthru
      _
    // Predicated region
    $region6: #{tpu_custom_call.1} parent=1 // pred_check
      _
    $region7: #{tpu_custom_call.1} parent=1 // pred_check_branch
      %18 = sbr.rel (0) target = $region9
    $region8: #{tpu_custom_call.1} parent=1 // pred_region
      _
    $region9: #{tpu_custom_call.1} parent=1 // pred_fallthru
      _
    // Predicated region
    $region10: #{tpu_custom_call.1} parent=1 // pred_check
      _
    $region11: #{tpu_custom_call.1} parent=1 // pred_check_branch
      %20 = sbr.rel (0) target = $region13
    $region12: #{tpu_custom_call.1} parent=1 // pred_region
      _
    $region13: #{tpu_custom_call.1} parent=1 // pred_fallthru
      _
    // Predicated region
    $region14: #{tpu_custom_call.1} parent=1 // pred_check
      _
    $region15: #{tpu_custom_call.1} parent=1 // pred_check_branch
      %22 = sbr.rel (0) target = $region17
    $region16: #{tpu_custom_call.1} parent=1 // pred_region
      _
    $region17: #{tpu_custom_call.1} parent=1 // pred_fallthru
      _
    // Predicated region
    $region18: #{tpu_custom_call.1} parent=1 // pred_check
      _
    $region19: #{tpu_custom_call.1} parent=1 // pred_check_branch
      %24 = sbr.rel (0) target = $region21
    $region20: #{tpu_custom_call.1} parent=1 // pred_region
      _
    $region21: #{tpu_custom_call.1} parent=1 // pred_fallthru
      _
    // Predicated region
    $region22: #{tpu_custom_call.1} parent=1 // pred_check
      _
    $region23: #{tpu_custom_call.1} parent=1 // pred_check_branch
      %26 = sbr.rel (0) target = $region25
    $region24: #{tpu_custom_call.1} parent=1 // pred_region
      _
    $region25: #{tpu_custom_call.1} parent=1 // pred_fallthru
      _
    // Predicated region
    $region26: #{tpu_custom_call.1} parent=1 // pred_check
      _
    $region27: #{tpu_custom_call.1} parent=1 // pred_check_branch
      %28 = sbr.rel (0) target = $region29
    $region28: #{tpu_custom_call.1} parent=1 // pred_region
      _
    $region29: #{tpu_custom_call.1} parent=1 // pred_fallthru
      _
    // Predicated region
    $region30: #{tpu_custom_call.1} parent=1 // pred_check
      _
    $region31: #{tpu_custom_call.1} parent=1 // pred_check_branch
      %30 = sbr.rel (0) target = $region33
    $region32: #{tpu_custom_call.1} parent=1 // pred_region
      _
    $region33: #{tpu_custom_call.1} parent=1 // pred_fallthru
      _
    // Predicated region
    $region34: #{tpu_custom_call.1} parent=1 // pred_check
      _
    $region35: #{tpu_custom_call.1} parent=1 // pred_check_branch
      %32 = sbr.rel (0) target = $region37
    $region36: #{tpu_custom_call.1} parent=1 // pred_region
      _
    $region37: #{tpu_custom_call.1} parent=1 // pred_fallthru
      _
    %v34 = vld [vmem:[%s0] sm:$0xf]
    %v35 = vld [vmem:[%s0 + $0x4] sm:$0xf]
    %v36 = vld [vmem:[%s0 + $0x8] sm:$0x1]
    %v37 = vld [vmem:[%s3] sm:$0xf]
    %v38 = vld [vmem:[%s3 + $0x4] sm:$0xf]
    %v39 = vld [vmem:[%s3 + $0x8] sm:$0xf]
    %v40 = vld [vmem:[%s3 + $0xc] sm:$0xf]
    %v41 = vld [vmem:[%s3 + $0x10] sm:$0xf]
    %v42 = vld [vmem:[%s3 + $0x14] sm:$0xf]
    %v43 = vld [vmem:[%s3 + $0x18] sm:$0xf]
    %v44 = vld [vmem:[%s3 + $0x1c] sm:$0xf]
    %v45 = vld [vmem:[%s3 + $0x20] sm:$0x3]
    %v46 = vld [vmem:[%s6] sm:$0xff]
    %v47 = vld [vmem:[%s6 + $0x8] sm:$0xff]
    %v48 = vld [vmem:[%s6 + $0x10] sm:$0xff]
    %v49 = vld [vmem:[%s6 + $0x18] sm:$0xff]
    %v50 = vld [vmem:[%s6 + $0x20] sm:$0xff]
    %v51 = vld [vmem:[%s6 + $0x28] sm:$0xff]
    %v52 = vld [vmem:[%s6 + $0x30] sm:$0xff]
    %v53 = vld [vmem:[%s6 + $0x38] sm:$0xff]
    %v54 = vld [vmem:[%s6 + $0x40] sm:$0xf]
    %56 = vset.pattern.permute.xlu0 0
    %57 = vperm.xlu0 %56, %v46
    %v58 = vpop.permute.xlu0 %57
    %61 = vset.pattern.permute.xlu0 0
    %62 = vperm.xlu0 %61, %v47
    %v63 = vpop.permute.xlu0 %62
    %66 = vset.pattern.permute.xlu0 0
    %67 = vperm.xlu0 %66, %v48
    %v68 = vpop.permute.xlu0 %67
    %71 = vset.pattern.permute.xlu0 0
    %72 = vperm.xlu0 %71, %v49
    %v73 = vpop.permute.xlu0 %72
    %76 = vset.pattern.permute.xlu0 0
    %77 = vperm.xlu0 %76, %v50
    %v78 = vpop.permute.xlu0 %77
    %81 = vset.pattern.permute.xlu0 0
    %82 = vperm.xlu0 %81, %v51
    %v83 = vpop.permute.xlu0 %82
    %86 = vset.pattern.permute.xlu0 0
    %87 = vperm.xlu0 %86, %v52
    %v88 = vpop.permute.xlu0 %87
    %91 = vset.pattern.permute.xlu0 0
    %92 = vperm.xlu0 %91, %v53
    %v93 = vpop.permute.xlu0 %92
    %96 = vset.pattern.permute.xlu0 0
    %97 = vperm.xlu0 %96, %v54
    %v98 = vpop.permute.xlu0 %97
    %v109 = vunpack.c.l.b16 %v37
    %v110 = vunpack.c.l.b16 %v38
    %v111 = vunpack.c.l.b16 %v39
    %v112 = vunpack.c.l.b16 %v40
    %v113 = vunpack.c.l.b16 %v41
    %v114 = vunpack.c.l.b16 %v42
    %v115 = vunpack.c.l.b16 %v43
    %v116 = vunpack.c.l.b16 %v44
    %v117 = vunpack.c.l.b16 %v45
    %v118 = vpack.c.b16 %v110, %v109
    %v119 = vpack.c.b16 %v112, %v111
    %v120 = vpack.c.b16 %v114, %v113
    %v121 = vpack.c.b16 %v116, %v115
    %v122 = vpack.c.b16 %v117, %v117
    %v126 = vunpack.c.l.b16 %v34
    %v127 = vunpack.c.l.b16 %v35
    %v128 = vunpack.c.l.b16 %v36
    %v129 = vpack.c.b16 %v127, %v126
    %v130 = vpack.c.b16 %v128, %v128
    %vm132 = vcmask 146432
    %v134 = vsel %vm132, %v118, 0
    %v137 = vsel %vm132, %v119, 0
    %v140 = vsel %vm132, %v120, 0
    %v143 = vsel %vm132, %v121, 0
    %v146 = vsel %vm132, %v122, 0
    %vm148 = vcmask 1040384
    %v150 = vsel %vm148, %v130, 0
    %152 = vmatpush.bf16.msra.mxu0 0
    %153 = vmatpush.bf16.msra.mxu0 0
    %154 = vmatpush.bf16.msra.mxu0 0
    %155 = vmatpush.bf16.msra.mxu0 0
    %156 = vmatpush.bf16.msra.mxu0 0
    %157 = vmatpush.bf16.msra.mxu0 0
    %158 = vmatpush.bf16.msra.mxu0 %v150
    %159 = vmatpush.bf16.msra.mxu0 %v129
    %160 = vmatmul.bf16.gmra.mxu0 %v134
    %v161 = vpop.f32.mrf.mxu0
    %v162 = vadd.f32 %v58, %v161
    %v163 = vpop.f32.mrf.mxu0
    %v164 = vadd.f32 %v63, %v163
    %165 = vmatmul.bf16.gmra.mxu0 %v137
    %v166 = vpop.f32.mrf.mxu0
    %v167 = vadd.f32 %v68, %v166
    %v168 = vpop.f32.mrf.mxu0
    %v169 = vadd.f32 %v73, %v168
    %170 = vmatmul.bf16.gmra.mxu0 %v140
    %v171 = vpop.f32.mrf.mxu0
    %v172 = vadd.f32 %v78, %v171
    %v173 = vpop.f32.mrf.mxu0
    %v174 = vadd.f32 %v83, %v173
    %175 = vmatmul.bf16.gmra.mxu0 %v143
    %v176 = vpop.f32.mrf.mxu0
    %v177 = vadd.f32 %v88, %v176
    %v178 = vpop.f32.mrf.mxu0
    %v179 = vadd.f32 %v93, %v178
    %180 = vmatmul.bf16.gmra.mxu0 %v146
    %v181 = vpop.f32.mrf.mxu0
    %v182 = vadd.f32 %v98, %v181
    %v183 = vpop.f32.mrf.mxu0
    %184 = vdwg.mxu0
    %v185 = vld [vmem:[%s1] sm:$0xff]
    %v186 = vld [vmem:[%s1 + $0x8] sm:$0xff]
    %v187 = vld [vmem:[%s1 + $0x10] sm:$0xff]
    %v188 = vld [vmem:[%s1 + $0x18] sm:$0xff]
    %v189 = vld [vmem:[%s1 + $0x20] sm:$0xff]
    %v190 = vld [vmem:[%s1 + $0x28] sm:$0xff]
    %v191 = vld [vmem:[%s1 + $0x30] sm:$0xff]
    %v192 = vld [vmem:[%s1 + $0x38] sm:$0xff]
    %v193 = vld [vmem:[%s1 + $0x40] sm:$0xf]
    %vm194 = vcmp.lt.f32.partialorder %v185, 0.9
    %vm195 = vcmp.lt.f32.partialorder %v186, 0.9
    %vm196 = vcmp.lt.f32.partialorder %v187, 0.9
    %vm197 = vcmp.lt.f32.partialorder %v188, 0.9
    %vm198 = vcmp.lt.f32.partialorder %v189, 0.9
    %vm199 = vcmp.lt.f32.partialorder %v190, 0.9
    %vm200 = vcmp.lt.f32.partialorder %v191, 0.9
    %vm201 = vcmp.lt.f32.partialorder %v192, 0.9
    %vm202 = vcmp.lt.f32.partialorder %v193, 0.9
    %v203 = vmul.f32 %v162, 1.1111112
    %v204 = vmul.f32 %v164, 1.1111112
    %v205 = vmul.f32 %v167, 1.1111112
    %v206 = vmul.f32 %v169, 1.1111112
    %v207 = vmul.f32 %v172, 1.1111112
    %v208 = vmul.f32 %v174, 1.1111112
    %v209 = vmul.f32 %v177, 1.1111112
    %v210 = vmul.f32 %v179, 1.1111112
    %v211 = vmul.f32 %v182, 1.1111112
    %v212 = vsel %vm194, %v203, 0.0
    %v213 = vsel %vm195, %v204, 0.0
    %v214 = vsel %vm196, %v205, 0.0
    %v215 = vsel %vm197, %v206, 0.0
    %v216 = vsel %vm198, %v207, 0.0
    %v217 = vsel %vm199, %v208, 0.0
    %v218 = vsel %vm200, %v209, 0.0
    %v219 = vsel %vm201, %v210, 0.0
    %v220 = vsel %vm202, %v211, 0.0
    %v221 = vtanh.pop %v212
    %v222 = vtanh.pop %v213
    %v223 = vtanh.pop %v214
    %v224 = vtanh.pop %v215
    %v225 = vtanh.pop %v216
    %v226 = vtanh.pop %v217
    %v227 = vtanh.pop %v218
    %v228 = vtanh.pop %v219
    %v229 = vtanh.pop %v220
    %v230 = vlaneseq
    %v231 = vshrl.u32 %v230, 7
    %v232 = vadd.s32 %v231, 8
    %v233 = vadd.s32 %v231, 16
    %v234 = vadd.s32 %v231, 24
    %v235 = vadd.s32 %v231, 32
    %v236 = vadd.s32 %v231, 40
    %v237 = vadd.s32 %v231, 48
    %v238 = vadd.s32 %v231, 56
    %v239 = vadd.s32 %v231, 64
    %vm240 = vcmp.lt.s32.totalorder %v231, 4
    %vm241 = vcmp.lt.s32.totalorder %v232, 4
    %vm242 = vcmp.lt.s32.totalorder %v233, 4
    %vm243 = vcmp.lt.s32.totalorder %v234, 4
    %vm244 = vcmp.lt.s32.totalorder %v235, 4
    %vm245 = vcmp.lt.s32.totalorder %v236, 4
    %vm246 = vcmp.lt.s32.totalorder %v237, 4
    %vm247 = vcmp.lt.s32.totalorder %v238, 4
    %vm248 = vcmp.lt.s32.totalorder %v239, 4
    %v249 = vsel %vm240, %v162, %v221
    %v250 = vsel %vm241, %v164, %v222
    %v251 = vsel %vm242, %v167, %v223
    %v252 = vsel %vm243, %v169, %v224
    %v253 = vsel %vm244, %v172, %v225
    %v254 = vsel %vm245, %v174, %v226
    %v255 = vsel %vm246, %v177, %v227
    %v256 = vsel %vm247, %v179, %v228
    %v257 = vsel %vm248, %v182, %v229
    %v258 = vld [vmem:[%s4] sm:$0xf]
    %v259 = vld [vmem:[%s4 + $0x4] sm:$0xf]
    %v260 = vld [vmem:[%s4 + $0x8] sm:$0xf]
    %v261 = vld [vmem:[%s4 + $0xc] sm:$0xf]
    %v262 = vpack.c.bf16 %v250, %v249
    %v263 = vpack.c.bf16 %v252, %v251
    %v264 = vpack.c.bf16 %v254, %v253
    %v265 = vpack.c.bf16 %v256, %v255
    %v266 = vpack.c.bf16 %v257, %v257
    %v267 = vld [vmem:[%s7] sm:$0xff]
    %v268 = vld [vmem:[%s7 + $0x8] sm:$0xff]
    %v269 = vld [vmem:[%s7 + $0x10] sm:$0xff]
    %v270 = vld [vmem:[%s7 + $0x18] sm:$0xff]
    %272 = vset.pattern.permute.xlu0 0
    %273 = vperm.xlu0 %272, %v267
    %v274 = vpop.permute.xlu0 %273
    %277 = vset.pattern.permute.xlu0 0
    %278 = vperm.xlu0 %277, %v268
    %v279 = vpop.permute.xlu0 %278
    %282 = vset.pattern.permute.xlu0 0
    %283 = vperm.xlu0 %282, %v269
    %v284 = vpop.permute.xlu0 %283
    %287 = vset.pattern.permute.xlu0 0
    %288 = vperm.xlu0 %287, %v270
    %v289 = vpop.permute.xlu0 %288
    %v295 = vunpack.c.l.b16 %v258
    %v296 = vunpack.c.l.b16 %v259
    %v297 = vunpack.c.l.b16 %v260
    %v298 = vunpack.c.l.b16 %v261
    %v299 = vpack.c.b16 %v296, %v295
    %v300 = vpack.c.b16 %v298, %v297
    %vm301 = vcmask 556032
    %v303 = vsel %vm301, %v299, 0
    %v306 = vsel %vm301, %v300, 0
    %vm308 = vcmask 1041408
    %v310 = vsel %vm308, %v266, 0
    %312 = vmatpush.bf16.msra.mxu0 0
    %313 = vmatpush.bf16.msra.mxu0 0
    %314 = vmatpush.bf16.msra.mxu0 0
    %315 = vmatpush.bf16.msra.mxu0 %v310
    %316 = vmatpush.bf16.msra.mxu0 %v265
    %317 = vmatpush.bf16.msra.mxu0 %v264
    %318 = vmatpush.bf16.msra.mxu0 %v263
    %319 = vmatpush.bf16.msra.mxu0 %v262
    %320 = vmatmul.bf16.gmra.mxu0 %v303
    %v321 = vpop.f32.mrf.mxu0
    %v322 = vadd.f32 %v274, %v321
    %v323 = vpop.f32.mrf.mxu0
    %v324 = vadd.f32 %v279, %v323
    %325 = vmatmul.bf16.gmra.mxu0 %v306
    %v326 = vpop.f32.mrf.mxu0
    %v327 = vadd.f32 %v284, %v326
    %v328 = vpop.f32.mrf.mxu0
    %v329 = vadd.f32 %v289, %v328
    %330 = vdwg.mxu0
    %v331 = vtanh.pop %v322
    %v332 = vtanh.pop %v324
    %v333 = vtanh.pop %v327
    %v334 = vtanh.pop %v329
    %v335 = vld [vmem:[%s5] sm:$0xf]
    %v336 = vld [vmem:[%s5 + $0x4] sm:$0x3]
    %v337 = vpack.c.bf16 %v332, %v331
    %v338 = vpack.c.bf16 %v334, %v333
    %v339 = vld [vmem:[%s8] sm:$0xff]
    %v340 = vld [vmem:[%s8 + $0x8] sm:$0x7]
    %342 = vset.pattern.permute.xlu0 0
    %343 = vperm.xlu0 %342, %v339
    %v344 = vpop.permute.xlu0 %343
    %347 = vset.pattern.permute.xlu0 0
    %348 = vperm.xlu0 %347, %v340
    %v349 = vpop.permute.xlu0 %348
    %v353 = vunpack.c.l.b16 %v335
    %v354 = vunpack.c.l.b16 %v336
    %v355 = vpack.c.b16 %v354, %v353
    %vm356 = vcmask 261120
    %v358 = vsel %vm356, %v355, 0
    %360 = vmatpush.bf16.msra.mxu0 0
    %361 = vmatpush.bf16.msra.mxu0 0
    %362 = vmatpush.bf16.msra.mxu0 0
    %363 = vmatpush.bf16.msra.mxu0 0
    %364 = vmatpush.bf16.msra.mxu0 0
    %365 = vmatpush.bf16.msra.mxu0 0
    %366 = vmatpush.bf16.msra.mxu0 %v338
    %367 = vmatpush.bf16.msra.mxu0 %v337
    %368 = vmatmul.bf16.gmra.mxu0 %v358
    %v369 = vpop.f32.mrf.mxu0
    %v370 = vadd.f32 %v344, %v369
    %v371 = vpop.f32.mrf.mxu0
    %v372 = vadd.f32 %v349, %v371
    %373 = vdwg.mxu0
    %vm374 = vcmp.ge.s32.totalorder %v231, 5
    %vm375 = vcmp.ge.s32.totalorder %v232, 5
    %v376 = vld [vmem:[%s2] sm:$0xff]
    %v377 = vld [vmem:[%s2 + $0x8] sm:$0x7]
    %v378 = vadd.f32 %v376, 1e-10
    %v379 = vadd.f32 %v377, 1e-10
    %v380 = vlog2.pop %v378
    %v381 = vmul.f32 %v380, 0.6931472
    %v382 = vlog2.pop %v379
    %v383 = vmul.f32 %v382, 0.6931472
    %v384 = vsub.f32 0.0, %v381
    %v385 = vsub.f32 0.0, %v383
    %v386 = vadd.f32 %v384, 1e-10
    %v387 = vadd.f32 %v385, 1e-10
    %v388 = vlog2.pop %v386
    %v389 = vmul.f32 %v388, 0.6931472
    %v390 = vlog2.pop %v387
    %v391 = vmul.f32 %v390, 0.6931472
    %v392 = vsub.f32 0.0, %v389
    %v393 = vsub.f32 0.0, %v391
    %v394 = vadd.f32 %v370, %v392
    %v395 = vadd.f32 %v372, %v393
    %v396 = vsel %vm374, %v394, -1e+30
    %v397 = vsel %vm375, %v395, -1e+30
    %vm398 = vcmask 1042432
    %v399 = vsel %vm398, %v397, -inf
    %v400 = vmax.f32 %v396, %v399
    %v401 = vrot.slane %v400, 4
    %v402 = vmax.f32 %v400, %v401
    %v403 = vrot.slane %v402, 2
    %v404 = vmax.f32 %v402, %v403
    %v405 = vrot.slane %v404, 1
    %v406 = vmax.f32 %v404, %v405
    %v407 = vsub.f32 %v396, %v406
    %v408 = vsub.f32 %v397, %v406
    %v409 = vmul.f32 %v407, 1.442695
    %v410 = vpow.pop %v409
    %v411 = vmul.f32 %v408, 1.442695
    %v412 = vpow.pop %v411
    %v413 = vsel %vm374, %v410, 0.0
    %v414 = vsel %vm375, %v412, 0.0
    %v415 = vsel %vm398, %v414, 0.0
    %v416 = vadd.f32 %v413, %v415
    %v417 = vrot.slane %v416, 4
    %v418 = vadd.f32 %v416, %v417
    %v419 = vrot.slane %v418, 2
    %v420 = vadd.f32 %v418, %v419
    %v421 = vrot.slane %v420, 1
    %v422 = vadd.f32 %v420, %v421
    %v423 = vrcp.pop %v422
    %v424 = vmul.f32 %v422, %v423
    %v425 = vsub.f32 1.0, %v424
    %v426 = vmul.f32 %v423, %v425
    %v427 = vadd.f32 %v423, %v426
    %vm428 = vweird.f32 %v422
    %vm429 = vweird.f32 %v423
    %vm430 = vmor %vm428, %vm429
    %v431 = vsel %vm430, %v423, %v427
    %v432 = vand.u32 2147483647, %v422
    %vm433 = vcmp.eq.f32.partialorder %v432, 8.507059e+37
    %v434 = vand.u32 %v422, 2147483648
    %v435 = vor.u32 1.1754944e-38, %v434
    %v436 = vsel %vm433, %v435, %v431
    %v437 = vmul.f32 %v413, %v436
    %v438 = vmul.f32 %v414, %v436
    %v439 = vsel %vm374, %v437, %v370
    %v440 = vsel %vm375, %v438, %v372
    %441 = vst [vmem:[#allocation2] sm:$0xff] %v439
    %442 = vst [vmem:[#allocation2 + $0x8] sm:$0x7] %v440
    // Predicated region
    $region38: #{tpu_custom_call.1} parent=1 // pred_check
      _
    $region39: #{tpu_custom_call.1} parent=1 // pred_check_branch
      %444 = sbr.rel (0) target = $region41
    $region40: #{tpu_custom_call.1} parent=1 // pred_region
      %446 = vsyncadd [#allocation3], 0
      %s447 = sshll.u32 [#allocation2], 4
      %s448 = int_to_ptr.vmem [resolvable:$true] %s447
      %s449 = sshll.u32 %s9, 4
      %s450 = int_to_ptr.hbm [resolvable:$true] %s449
      %455 = dma.vmem_to_hbm [thread:$0]  %s448, 256, %s450, [#allocation3], 128, 128, 8
    $region41: #{tpu_custom_call.1} parent=1 // pred_fallthru
      _
    // Predicated region
    $region42: #{tpu_custom_call.1} parent=1 // pred_check
      _
    $region43: #{tpu_custom_call.1} parent=1 // pred_check_branch
      %457 = sbr.rel (0) target = $region45
    $region44: #{tpu_custom_call.1} parent=1 // pred_region
      %459 = dma.done [#allocation3], 256
    $region45: #{tpu_custom_call.1} parent=1 // pred_fallthru
      _
    %460 = vsyncpa [#allocation3], 1

</llo_original>
